<compile_context>
chip_gen: v6e
topology: v6e:2x2x1
jax: 0.10.0
libtpu: 0.0.40
codegen_flags: <defaults>
</compile_context>

<pallas_src>
import functools

import jax
import jax.numpy as jnp
from jax.experimental import pallas as pl
from jax.experimental.pallas import tpu as pltpu


def _attention_kernel(n_branches, *refs):
    """One (batch, spatial-tile) grid step.

    refs = x_0..x_{nb-1}   (C_i, TN)    bf16 feature tiles (channels on sublanes)
           w_0..w_{nb-1}   (C_i, C_i)   bf16 folded conv+BN weights (resident)
           b_0..b_{nb-1}   (C_i, 1)     f32 folded conv+BN biases   (resident)
           wf              (8, Ctot)    bf16 fuse-conv weight (row 0; rows 1-7 zero)
           bf              (1, 1)       f32 fuse-conv bias (SMEM scalar)
           c_ref           (Ctot, TN)   output: concatenated class maps (bf16)
           a_ref           (1, TN)      output: sigmoid attention map (f32)
    """
    nb = n_branches
    x_refs = refs[:nb]
    w_refs = refs[nb:2 * nb]
    b_refs = refs[2 * nb:3 * nb]
    wf_ref, bf_ref, c_ref, a_ref = refs[3 * nb:3 * nb + 4]

    # Per-branch: 1x1 conv (+ folded BN scale) as a small bf16 MXU matmul,
    # then bias + residual skip + ReLU in f32.
    ys = []
    for x_ref, w_ref, b_ref in zip(x_refs, w_refs, b_refs):
        x = x_ref[...]                                                  # (C_i, TN) bf16
        y = jnp.dot(w_ref[...], x, preferred_element_type=jnp.float32)  # MXU, f32 acc
        y = y + b_ref[...] + x.astype(jnp.float32)                      # bias + skip
        ys.append(jnp.maximum(y, 0.0))                                  # ReLU

    # Channel-axis concat (sublane axis) in f32: every offset is a multiple of
    # the native 8-sublane f32 tile -> cheap. One dense bf16 store.
    y_cat = jnp.concatenate(ys, axis=0)                                  # (Ctot, TN) f32
    y_bf = y_cat.astype(c_ref.dtype)
    c_ref[...] = y_bf                                                    # lane-dense store

    # Fuse conv = tiny matmul over channels (row 0 carries wf); lane axis dense.
    a8 = jnp.dot(wf_ref[...], y_bf, preferred_element_type=jnp.float32)  # (8, TN)
    a_ref[...] = jax.nn.sigmoid(a8[0:1, :] + bf_ref[0, 0])


def attention_mech_pallas(features, params, *, max_tile_hw=2048,
                          feature_dtype=jnp.bfloat16, out_dtype=jnp.bfloat16):
    """features: list of NCHW float32 arrays with identical B, H, W."""
    B, _, H, W = features[0].shape
    channels = [int(f.shape[1]) for f in features]
    nb = len(channels)
    ctot = sum(channels)
    HW = H * W

    # NCHW -> (B, C_i, HW): a pure reshape, no data-movement transpose.
    xs = [f.reshape(B, c, HW) for f, c in zip(features, channels)]

    # Pad the spatial (lane) axis to a multiple of 128 if needed (ragged case).
    hw_pad = (-HW) % 128
    if hw_pad:
        xs = [jnp.pad(x, ((0, 0), (0, 0), (0, hw_pad))) for x in xs]
    HWp = HW + hw_pad
    xs = [x.astype(feature_dtype) for x in xs]

    # Largest lane-tile that divides HWp, capped (amortizes ~0.35us/step and
    # issues big dense DMAs). VMEM use stays tiny (< a few MB) even at 2048.
    tile_hw = min(max_tile_hw, HWp)
    tile_hw -= tile_hw % 128
    while tile_hw > 128 and HWp % tile_hw != 0:
        tile_hw -= 128

    # Fold each branch's conv bias + eval-mode BatchNorm into (W, b):
    #   BN(W x + b) = (s*W) x + (b - mean)*s + beta,  s = gamma / sqrt(var+eps)
    ws, bs = [], []
    for p, c in zip(params["branches"], channels):
        s = p["bn_gamma"] / jnp.sqrt(p["bn_var"] + 1e-5)               # (C,)
        w_fold = (p["conv_w"][:, :, 0, 0] * s[:, None]).astype(feature_dtype)
        b_fold = ((p["conv_b"] - p["bn_mean"]) * s + p["bn_beta"])
        ws.append(w_fold)                                               # (C, C) bf16
        bs.append(b_fold.reshape(c, 1).astype(jnp.float32))             # (C, 1) f32

    # Fuse conv weight as row 0 of an (8, Ctot) operand (MXU-friendly M dim).
    wf = jnp.zeros((8, ctot), feature_dtype)
    wf = wf.at[0, :].set(params["fuse_w"][0, :, 0, 0].astype(feature_dtype))
    bf = params["fuse_b"].reshape(1, 1).astype(jnp.float32)

    grid = (B, HWp // tile_hw)
    x_specs = [pl.BlockSpec((None, c, tile_hw), lambda b, j: (b, 0, j))
               for c in channels]
    w_specs = [pl.BlockSpec((c, c), lambda b, j: (0, 0)) for c in channels]
    b_specs = [pl.BlockSpec((c, 1), lambda b, j: (0, 0)) for c in channels]
    in_specs = x_specs + w_specs + b_specs + [
        pl.BlockSpec((8, ctot), lambda b, j: (0, 0)),                  # fuse weight
        pl.BlockSpec(memory_space=pltpu.MemorySpace.SMEM),             # fuse bias scalar
    ]
    out_specs = [
        pl.BlockSpec((None, ctot, tile_hw), lambda b, j: (b, 0, j)),   # c (lane-dense)
        pl.BlockSpec((None, 1, tile_hw), lambda b, j: (b, 0, j)),      # a (lane-dense)
    ]
    out_shape = [jax.ShapeDtypeStruct((B, ctot, HWp), out_dtype),
                 jax.ShapeDtypeStruct((B, 1, HWp), jnp.float32)]

    kernel = functools.partial(_attention_kernel, nb)
    c_flat, a_flat = pl.pallas_call(
        kernel,
        grid=grid,
        in_specs=in_specs,
        out_specs=out_specs,
        out_shape=out_shape,
        compiler_params=pltpu.CompilerParams(
            dimension_semantics=("parallel", "parallel"),   # megacore-shardable
            vmem_limit_bytes=32 * 1024 * 1024,              # safe on v5e/v6e/v7x
        ),
    )(*xs, *ws, *bs, wf, bf)

    # Back to PyTorch NCHW convention: pure reshape (drop any spatial padding).
    c = c_flat[:, :, :HW].reshape(B, ctot, H, W)
    a = a_flat[:, :, :HW].reshape(B, 1, H, W)
    return a, c


def attention_mech_ref(features, params):
    """Pure-JAX reference mirroring the PyTorch ops (NCHW, f32)."""
    cmaps = []
    for f, p in zip(features, params["branches"]):
        w = p["conv_w"][:, :, 0, 0]                                    # (Cout, Cin)
        y = jnp.einsum("bchw,oc->bohw", f, w) + p["conv_b"][None, :, None, None]
        s = p["bn_gamma"] / jnp.sqrt(p["bn_var"] + 1e-5)
        y = (y - p["bn_mean"][None, :, None, None]) * s[None, :, None, None] \
            + p["bn_beta"][None, :, None, None]
        cmaps.append(jax.nn.relu(y + f))
    c = jnp.concatenate(cmaps, axis=1)
    wf = params["fuse_w"][:, :, 0, 0]
    a = jax.nn.sigmoid(jnp.einsum("bchw,oc->bohw", c, wf)
                       + params["fuse_b"][None, :, None, None])
    return a, c


def init_params(key, channels):
    params = {"branches": []}
    for c in channels:
        key, k1, k2, k3, k4, k5, k6 = jax.random.split(key, 7)
        params["branches"].append({
            "conv_w": 0.1 * jax.random.normal(k1, (c, c, 1, 1), jnp.float32),
            "conv_b": 0.1 * jax.random.normal(k2, (c,), jnp.float32),
            "bn_gamma": 1.0 + 0.1 * jax.random.normal(k3, (c,), jnp.float32),
            "bn_beta": 0.1 * jax.random.normal(k4, (c,), jnp.float32),
            "bn_mean": 0.1 * jax.random.normal(k5, (c,), jnp.float32),
            "bn_var": jnp.abs(1.0 + 0.1 * jax.random.normal(k6, (c,), jnp.float32)),
        })
    ctot = sum(channels)
    key, k1, k2 = jax.random.split(key, 3)
    params["fuse_w"] = 0.1 * jax.random.normal(k1, (1, ctot, 1, 1), jnp.float32)
    params["fuse_b"] = 0.1 * jax.random.normal(k2, (1,), jnp.float32)
    return params


if __name__ == "__main__":
    key = jax.random.PRNGKey(0)
    B, H, W = 2, 16, 16
    channels = [8, 16, 32]

    key, kp = jax.random.split(key)
    params = init_params(kp, channels)

    features = []
    for c in channels:
        key, kf = jax.random.split(key)
        features.append(jax.random.normal(kf, (B, c, H, W), jnp.float32))

    a, c = attention_mech_pallas(features, params)
    jax.block_until_ready((a, c))

    a_ref, c_ref = attention_mech_ref(features, params)
    assert a.shape == (B, 1, H, W) and c.shape == (B, sum(channels), H, W)
    # bf16 feature/weight/output traffic vs f32 reference -> loosened tolerance
    # (accumulation is f32, so the error is just bf16 I/O rounding).
    assert jnp.allclose(a, a_ref, atol=2e-2, rtol=2e-2)
    assert jnp.allclose(c.astype(jnp.float32), c_ref, atol=8e-2, rtol=8e-2)

    print("KERNEL_OK")
</pallas_src>

<mosaic_0001>
module attributes {stable_mosaic.version = 11 : i64} {
  func.func @_attention_kernel(%arg0: i32, %arg1: i32, %arg2: memref<1x8x256xbf16, #tpu.memory_space<vmem>>, %arg3: memref<1x16x256xbf16, #tpu.memory_space<vmem>>, %arg4: memref<1x32x256xbf16, #tpu.memory_space<vmem>>, %arg5: memref<8x8xbf16, #tpu.memory_space<vmem>>, %arg6: memref<16x16xbf16, #tpu.memory_space<vmem>>, %arg7: memref<32x32xbf16, #tpu.memory_space<vmem>>, %arg8: memref<8x1xf32, #tpu.memory_space<vmem>>, %arg9: memref<16x1xf32, #tpu.memory_space<vmem>>, %arg10: memref<32x1xf32, #tpu.memory_space<vmem>>, %arg11: memref<8x56xbf16, #tpu.memory_space<vmem>>, %arg12: memref<1x1xf32, #tpu.memory_space<smem>>, %arg13: memref<1x56x256xbf16, #tpu.memory_space<vmem>>, %arg14: memref<1x1x256xf32, #tpu.memory_space<vmem>>) attributes {dimension_semantics = [#tpu.dimension_semantics<parallel>, #tpu.dimension_semantics<parallel>], iteration_bounds = array<i64: 2, 1>, scalar_prefetch = 0 : i64, scratch_operands = 0 : i64, tpu.core_type = #tpu.core_type<tc>, window_params = [{transform_indices = @transform_0, window_bounds = array<i64: 1, 8, 256>}, {transform_indices = @transform_1, window_bounds = array<i64: 1, 16, 256>}, {transform_indices = @transform_2, window_bounds = array<i64: 1, 32, 256>}, {pipeline_mode = #tpu.pipeline_mode<synchronous>, transform_indices = @transform_3, window_bounds = array<i64: 8, 8>}, {pipeline_mode = #tpu.pipeline_mode<synchronous>, transform_indices = @transform_4, window_bounds = array<i64: 16, 16>}, {pipeline_mode = #tpu.pipeline_mode<synchronous>, transform_indices = @transform_5, window_bounds = array<i64: 32, 32>}, {pipeline_mode = #tpu.pipeline_mode<synchronous>, transform_indices = @transform_6, window_bounds = array<i64: 8, 1>}, {pipeline_mode = #tpu.pipeline_mode<synchronous>, transform_indices = @transform_7, window_bounds = array<i64: 16, 1>}, {pipeline_mode = #tpu.pipeline_mode<synchronous>, transform_indices = @transform_8, window_bounds = array<i64: 32, 1>}, {pipeline_mode = #tpu.pipeline_mode<synchronous>, transform_indices = @transform_9, window_bounds = array<i64: 8, 56>}, {transform_indices = @transform_10, window_bounds = array<i64: 1, 1>}, {transform_indices = @transform_11, window_bounds = array<i64: 1, 56, 256>}, {transform_indices = @transform_12, window_bounds = array<i64: 1, 1, 256>}]} {
    %c0 = arith.constant 0 : index
    %c0_0 = arith.constant 0 : index
    %c0_1 = arith.constant 0 : index
    %0 = vector.load %arg2[%c0, %c0_0, %c0_1] : memref<1x8x256xbf16, #tpu.memory_space<vmem>>, vector<1x8x256xbf16>
    %1 = vector.shape_cast %0 : vector<1x8x256xbf16> to vector<8x256xbf16>
    %c0_2 = arith.constant 0 : index
    %c0_3 = arith.constant 0 : index
    %2 = vector.load %arg5[%c0_2, %c0_3] : memref<8x8xbf16, #tpu.memory_space<vmem>>, vector<8x8xbf16>
    %cst = arith.constant dense<0.000000e+00> : vector<8x256xf32>
    %3 = tpu.matmul %2, %1, %cst {dimension_numbers = #tpu.dot_dimension_numbers<[1], [0], [0], [1], [0, 0, 1, 1], [], []>} : vector<8x8xbf16>, vector<8x256xbf16>, vector<8x256xf32> -> vector<8x256xf32>
    %c0_4 = arith.constant 0 : index
    %c0_5 = arith.constant 0 : index
    %4 = vector.load %arg8[%c0_4, %c0_5] : memref<8x1xf32, #tpu.memory_space<vmem>>, vector<8x1xf32>
    %5 = vector.broadcast %4 : vector<8x1xf32> to vector<8x256xf32>
    %6 = arith.addf %3, %5 : vector<8x256xf32>
    %7 = arith.extf %1 : vector<8x256xbf16> to vector<8x256xf32>
    %8 = arith.addf %6, %7 : vector<8x256xf32>
    %cst_6 = arith.constant 0.000000e+00 : f32
    %9 = vector.broadcast %cst_6 : f32 to vector<8x256xf32>
    %10 = arith.maximumf %8, %9 : vector<8x256xf32>
    %c0_7 = arith.constant 0 : index
    %c0_8 = arith.constant 0 : index
    %c0_9 = arith.constant 0 : index
    %11 = vector.load %arg3[%c0_7, %c0_8, %c0_9] : memref<1x16x256xbf16, #tpu.memory_space<vmem>>, vector<1x16x256xbf16>
    %12 = vector.shape_cast %11 : vector<1x16x256xbf16> to vector<16x256xbf16>
    %c0_10 = arith.constant 0 : index
    %c0_11 = arith.constant 0 : index
    %13 = vector.load %arg6[%c0_10, %c0_11] : memref<16x16xbf16, #tpu.memory_space<vmem>>, vector<16x16xbf16>
    %cst_12 = arith.constant dense<0.000000e+00> : vector<16x256xf32>
    %14 = tpu.matmul %13, %12, %cst_12 {dimension_numbers = #tpu.dot_dimension_numbers<[1], [0], [0], [1], [0, 0, 1, 1], [], []>} : vector<16x16xbf16>, vector<16x256xbf16>, vector<16x256xf32> -> vector<16x256xf32>
    %c0_13 = arith.constant 0 : index
    %c0_14 = arith.constant 0 : index
    %15 = vector.load %arg9[%c0_13, %c0_14] : memref<16x1xf32, #tpu.memory_space<vmem>>, vector<16x1xf32>
    %16 = vector.broadcast %15 : vector<16x1xf32> to vector<16x256xf32>
    %17 = arith.addf %14, %16 : vector<16x256xf32>
    %18 = arith.extf %12 : vector<16x256xbf16> to vector<16x256xf32>
    %19 = arith.addf %17, %18 : vector<16x256xf32>
    %cst_15 = arith.constant 0.000000e+00 : f32
    %20 = vector.broadcast %cst_15 : f32 to vector<16x256xf32>
    %21 = arith.maximumf %19, %20 : vector<16x256xf32>
    %c0_16 = arith.constant 0 : index
    %c0_17 = arith.constant 0 : index
    %c0_18 = arith.constant 0 : index
    %22 = vector.load %arg4[%c0_16, %c0_17, %c0_18] : memref<1x32x256xbf16, #tpu.memory_space<vmem>>, vector<1x32x256xbf16>
    %23 = vector.shape_cast %22 : vector<1x32x256xbf16> to vector<32x256xbf16>
    %c0_19 = arith.constant 0 : index
    %c0_20 = arith.constant 0 : index
    %24 = vector.load %arg7[%c0_19, %c0_20] : memref<32x32xbf16, #tpu.memory_space<vmem>>, vector<32x32xbf16>
    %cst_21 = arith.constant dense<0.000000e+00> : vector<32x256xf32>
    %25 = tpu.matmul %24, %23, %cst_21 {dimension_numbers = #tpu.dot_dimension_numbers<[1], [0], [0], [1], [0, 0, 1, 1], [], []>} : vector<32x32xbf16>, vector<32x256xbf16>, vector<32x256xf32> -> vector<32x256xf32>
    %c0_22 = arith.constant 0 : index
    %c0_23 = arith.constant 0 : index
    %26 = vector.load %arg10[%c0_22, %c0_23] : memref<32x1xf32, #tpu.memory_space<vmem>>, vector<32x1xf32>
    %27 = vector.broadcast %26 : vector<32x1xf32> to vector<32x256xf32>
    %28 = arith.addf %25, %27 : vector<32x256xf32>
    %29 = arith.extf %23 : vector<32x256xbf16> to vector<32x256xf32>
    %30 = arith.addf %28, %29 : vector<32x256xf32>
    %cst_24 = arith.constant 0.000000e+00 : f32
    %31 = vector.broadcast %cst_24 : f32 to vector<32x256xf32>
    %32 = arith.maximumf %30, %31 : vector<32x256xf32>
    %33 = tpu.concatenate %10, %21, %32 in 0 : vector<8x256xf32>, vector<16x256xf32>, vector<32x256xf32> -> vector<56x256xf32>
    %34 = arith.truncf %33 : vector<56x256xf32> to vector<56x256xbf16>
    %c0_25 = arith.constant 0 : index
    %c0_26 = arith.constant 0 : index
    %c0_27 = arith.constant 0 : index
    %35 = vector.load %arg13[%c0_25, %c0_26, %c0_27] : memref<1x56x256xbf16, #tpu.memory_space<vmem>>, vector<1x56x256xbf16>
    %36 = vector.shape_cast %35 : vector<1x56x256xbf16> to vector<56x256xbf16>
    %37 = vector.shape_cast %34 : vector<56x256xbf16> to vector<1x56x256xbf16>
    tpu.vector_store %arg13[%c0_25, %c0_26, %c0_27], %37 {strides = array<i32>} : memref<1x56x256xbf16, #tpu.memory_space<vmem>>, vector<1x56x256xbf16>,
    %c0_28 = arith.constant 0 : index
    %c0_29 = arith.constant 0 : index
    %38 = vector.load %arg11[%c0_28, %c0_29] : memref<8x56xbf16, #tpu.memory_space<vmem>>, vector<8x56xbf16>
    %cst_30 = arith.constant dense<0.000000e+00> : vector<8x256xf32>
    %39 = tpu.matmul %38, %34, %cst_30 {dimension_numbers = #tpu.dot_dimension_numbers<[1], [0], [0], [1], [0, 0, 1, 1], [], []>} : vector<8x56xbf16>, vector<56x256xbf16>, vector<8x256xf32> -> vector<8x256xf32>
    %40 = vector.extract_strided_slice %39 {offsets = [0, 0], sizes = [1, 256], strides = [1, 1]} : vector<8x256xf32> to vector<1x256xf32>
    %c0_31 = arith.constant 0 : index
    %c0_32 = arith.constant 0 : index
    %41 = memref.load %arg12[%c0_31, %c0_32] : memref<1x1xf32, #tpu.memory_space<smem>>
    %42 = vector.broadcast %41 : f32 to vector<1x256xf32>
    %43 = arith.addf %40, %42 : vector<1x256xf32>
    %44 = arith.negf %43 : vector<1x256xf32>
    %45 = math.exp %44 : vector<1x256xf32>
    %cst_33 = arith.constant 1.000000e+00 : f32
    %46 = vector.broadcast %cst_33 : f32 to vector<1x256xf32>
    %47 = arith.addf %46, %45 : vector<1x256xf32>
    %48 = arith.divf %46, %47 : vector<1x256xf32>
    %c0_34 = arith.constant 0 : index
    %c0_35 = arith.constant 0 : index
    %c0_36 = arith.constant 0 : index
    %49 = vector.load %arg14[%c0_34, %c0_35, %c0_36] : memref<1x1x256xf32, #tpu.memory_space<vmem>>, vector<1x1x256xf32>
    %50 = vector.shape_cast %49 : vector<1x1x256xf32> to vector<1x256xf32>
    %51 = vector.shape_cast %48 : vector<1x256xf32> to vector<1x1x256xf32>
    tpu.vector_store %arg14[%c0_34, %c0_35, %c0_36], %51 {strides = array<i32>} : memref<1x1x256xf32, #tpu.memory_space<vmem>>, vector<1x1x256xf32>,
    return
  }
  func.func @transform_0(%arg0: i32, %arg1: i32) -> (i32, i32, i32) {
    %c0_i32 = arith.constant 0 : i32
    %c0_i32_0 = arith.constant 0 : i32
    return %arg0, %c0_i32, %arg1 : i32, i32, i32
  }
  func.func @transform_1(%arg0: i32, %arg1: i32) -> (i32, i32, i32) {
    %c0_i32 = arith.constant 0 : i32
    %c0_i32_0 = arith.constant 0 : i32
    return %arg0, %c0_i32, %arg1 : i32, i32, i32
  }
  func.func @transform_2(%arg0: i32, %arg1: i32) -> (i32, i32, i32) {
    %c0_i32 = arith.constant 0 : i32
    %c0_i32_0 = arith.constant 0 : i32
    return %arg0, %c0_i32, %arg1 : i32, i32, i32
  }
  func.func @transform_3(%arg0: i32, %arg1: i32) -> (i32, i32) {
    %c0_i32 = arith.constant 0 : i32
    %c0_i32_0 = arith.constant 0 : i32
    %c0_i32_1 = arith.constant 0 : i32
    return %c0_i32, %c0_i32_0 : i32, i32
  }
  func.func @transform_4(%arg0: i32, %arg1: i32) -> (i32, i32) {
    %c0_i32 = arith.constant 0 : i32
    %c0_i32_0 = arith.constant 0 : i32
    %c0_i32_1 = arith.constant 0 : i32
    return %c0_i32, %c0_i32_0 : i32, i32
  }
  func.func @transform_5(%arg0: i32, %arg1: i32) -> (i32, i32) {
    %c0_i32 = arith.constant 0 : i32
    %c0_i32_0 = arith.constant 0 : i32
    %c0_i32_1 = arith.constant 0 : i32
    return %c0_i32, %c0_i32_0 : i32, i32
  }
  func.func @transform_6(%arg0: i32, %arg1: i32) -> (i32, i32) {
    %c0_i32 = arith.constant 0 : i32
    %c0_i32_0 = arith.constant 0 : i32
    %c0_i32_1 = arith.constant 0 : i32
    return %c0_i32, %c0_i32_0 : i32, i32
  }
  func.func @transform_7(%arg0: i32, %arg1: i32) -> (i32, i32) {
    %c0_i32 = arith.constant 0 : i32
    %c0_i32_0 = arith.constant 0 : i32
    %c0_i32_1 = arith.constant 0 : i32
    return %c0_i32, %c0_i32_0 : i32, i32
  }
  func.func @transform_8(%arg0: i32, %arg1: i32) -> (i32, i32) {
    %c0_i32 = arith.constant 0 : i32
    %c0_i32_0 = arith.constant 0 : i32
    %c0_i32_1 = arith.constant 0 : i32
    return %c0_i32, %c0_i32_0 : i32, i32
  }
  func.func @transform_9(%arg0: i32, %arg1: i32) -> (i32, i32) {
    %c0_i32 = arith.constant 0 : i32
    %c0_i32_0 = arith.constant 0 : i32
    %c0_i32_1 = arith.constant 0 : i32
    return %c0_i32, %c0_i32_0 : i32, i32
  }
  func.func @transform_10(%arg0: i32, %arg1: i32) -> (i32, i32) {
    %c0_i32 = arith.constant 0 : i32
    %c0_i32_0 = arith.constant 0 : i32
    %c0_i32_1 = arith.constant 0 : i32
    return %c0_i32, %c0_i32_0 : i32, i32
  }
  func.func @transform_11(%arg0: i32, %arg1: i32) -> (i32, i32, i32) {
    %c0_i32 = arith.constant 0 : i32
    %c0_i32_0 = arith.constant 0 : i32
    return %arg0, %c0_i32, %arg1 : i32, i32, i32
  }
  func.func @transform_12(%arg0: i32, %arg1: i32) -> (i32, i32, i32) {
    %c0_i32 = arith.constant 0 : i32
    %c0_i32_0 = arith.constant 0 : i32
    return %arg0, %c0_i32, %arg1 : i32, i32, i32
  }
}

</mosaic_0001>

<llo_original>
// kernel: tpu_custom_call.1
$region0: #{tpu_custom_call.1}
  #allocation0 [shape = 'u32[]', space=smem, size = 0x4, offset = 0x4, fixed_abs, tag = 'smem constant byte address 0x4 - core index']
  #allocation1 [shape = 'u32[144,128]{1,0:T(1,128)}', space=vmem, size = 0x12000, scoped, tag = 'internal scratch']
  #allocation2 [shape = 'f32[1,1]{1,0:T(1,128)S(6)}', space=smem, size = 0x200, scoped, tag = 'scoped memory for tpu_custom_call.1']
  %s0 = inlined_call_operand.hbm [shape: bf16[2,8,256], index: 0, kind: input, shape index: {}]
  %s1 = inlined_call_operand.hbm [shape: bf16[2,16,256], index: 1, kind: input, shape index: {}]
  %s2 = inlined_call_operand.vmem [shape: bf16[2,32,256], index: 2, kind: input, shape index: {}]
  %s3 = inlined_call_operand.hbm [shape: bf16[8,8], index: 3, kind: input, shape index: {}]
  %s4 = inlined_call_operand.hbm [shape: bf16[16,16], index: 4, kind: input, shape index: {}]
  %s5 = inlined_call_operand.hbm [shape: bf16[32,32], index: 5, kind: input, shape index: {}]
  %s6 = inlined_call_operand.vmem [shape: f32[8,1], index: 6, kind: input, shape index: {}]
  %s7 = inlined_call_operand.vmem [shape: f32[16,1], index: 7, kind: input, shape index: {}]
  %s8 = inlined_call_operand.vmem [shape: f32[32,1], index: 8, kind: input, shape index: {}]
  %s9 = inlined_call_operand.vmem [shape: bf16[8,56], index: 9, kind: input, shape index: {}]
  %s10 = inlined_call_operand.<no memory space> [shape: f32[1,1], index: 10, kind: input, shape index: {}]
  %s11 = inlined_call_operand.hbm [shape: bf16[2,56,256], index: 11, kind: output, shape index: {0}]
  %s12 = inlined_call_operand.hbm [shape: f32[2,1,256], index: 12, kind: output, shape index: {1}]
  %13 = xla_tuple %s11, %s12
  %s14 = sld [smem:[#allocation0]]
  $region105: #{tpu_custom_call.1} parent=0
    _
  %s16 = ssub.s32 1, %s14
  %s17 = scalar_select 0, %s16, %s14
  %18 = sst [smem:[#allocation2]] %s10
  $region1: #{tpu_custom_call.1} parent=0
    #allocation3 [shape = 'u8[8192]{0}', space=vmem, size = 0x2000, scoped, tag = 'input window, operand 0']
    #allocation4 [shape = 's32[2]{0}', space=sflag, size = 0x8, scoped, tag = 'scoped memory for tpu_custom_call.1']
    #allocation5 [shape = 's32[2]{0}', space=sflag, size = 0x8, scoped, tag = 'scoped memory for tpu_custom_call.1']
    #allocation6 [shape = 'u8[16384]{0}', space=vmem, size = 0x4000, scoped, tag = 'input window, operand 1']
    #allocation7 [shape = 's32[2]{0}', space=sflag, size = 0x8, scoped, tag = 'scoped memory for tpu_custom_call.1']
    #allocation8 [shape = 'u8[2048]{0}', space=vmem, size = 0x800, scoped, tag = 'input window, operand 3, single buffered']
    #allocation9 [shape = 'u8[4096]{0}', space=vmem, size = 0x1000, scoped, tag = 'input window, operand 4, single buffered']
    #allocation10 [shape = 's32[1]{0}', space=sflag, size = 0x4, scoped, tag = 'scoped memory for tpu_custom_call.1']
    #allocation11 [shape = 'u8[8192]{0}', space=vmem, size = 0x2000, scoped, tag = 'input window, operand 5, single buffered']
    #allocation12 [shape = 'u8[57344]{0}', space=vmem, size = 0xe000, scoped, tag = 'output window, operand 0']
    #allocation13 [shape = 'u8[2048]{0}', space=vmem, size = 0x800, scoped, tag = 'output window, operand 1']
    #allocation14 [shape = 's32[2]{0}', space=sflag, size = 0x8, scoped, tag = 'scoped memory for tpu_custom_call.1']
    %19 = vsyncpa [#allocation4], 0
    %s20 = scalar_lea.sflag [#allocation4], 1
    %21 = vsyncpa %s20, 0
    %22 = vsyncpa [#allocation7], 0
    %s23 = scalar_lea.sflag [#allocation7], 1
    %24 = vsyncpa %s23, 0
    %25 = vsyncpa [#allocation10], 0
    %26 = vsyncpa [#allocation5], 0
    %s27 = scalar_lea.sflag [#allocation5], 1
    %28 = vsyncpa %s27, 0
    %29 = vsyncpa [#allocation14], 0
    %s30 = scalar_lea.sflag [#allocation14], 1
    %31 = vsyncpa %s30, 0
    loop: start=0, step=1, limit=4
    $region2: #{tpu_custom_call.1} parent=1 // loop_pre_header
      _
    $region3: #{tpu_custom_call.1} parent=1 // loop_header
      %s33 = sphi 0, %s37
      %p34 = scmp.ge.s32.totalorder %s33, 4
      %s40 = sphi 0, %s52
      %s41 = sphi 0, %s48
      %s42 = sphi 0, %s40
      %s43 = sphi 0, %s41
      %s44 = sphi 0, %s42
      %s45 = sphi 0, %s43
      %s57 = sphi 0, %s59
      %s60 = sphi 0, %s57
      %s61 = sphi 0, %s60
      %s77 = sphi 0, %s61
      %s85 = sphi 0, %s87
      %s88 = sphi 0, %s85
      %s89 = sphi 0, %s88
      %s105 = sphi 0, %s89
      %s113 = sphi 0, %s115
      %s116 = sphi 0, %s113
      %s117 = sphi 0, %s116
      %s133 = sphi 0, %s117
      %s137 = sphi 0, %s137
      %s139 = sphi 0, %s137
      %s140 = sphi 0, %s139
      %s154 = sphi 0, %s140
      %s158 = sphi 0, %s158
      %s160 = sphi 0, %s158
      %s161 = sphi 0, %s160
      %s175 = sphi 0, %s161
      %s179 = sphi 0, %s179
      %s181 = sphi 0, %s179
      %s182 = sphi 0, %s181
      %s196 = sphi 0, %s182
      %s200 = sphi 0, %s200
      %s202 = sphi 0, %s200
      %s203 = sphi 0, %s202
      %s217 = sphi 0, %s203
      %s221 = sphi 0, %s221
      %s223 = sphi 0, %s221
      %s224 = sphi 0, %s223
      %s238 = sphi 0, %s224
      %s242 = sphi 0, %s242
      %s244 = sphi 0, %s242
      %s245 = sphi 0, %s244
      %s259 = sphi 0, %s245
      %s263 = sphi 0, %s263
      %s265 = sphi 0, %s263
      %s266 = sphi 0, %s265
      %s280 = sphi 0, %s266
      %s284 = sphi 0, %s284
      %s286 = sphi 0, %s284
      %s287 = sphi 0, %s286
      %s301 = sphi 0, %s287
      %s309 = sphi 0, %s311
      %s312 = sphi 0, %s309
      %s313 = sphi 0, %s312
      %s329 = sphi 0, %s313
      %s337 = sphi 0, %s339
      %s340 = sphi 0, %s337
      %s341 = sphi 0, %s340
      %s357 = sphi 0, %s341
    $region4: #{tpu_custom_call.1} parent=1 // loop_header_branch
      %36 = sbr.rel (%p34) target = $region8
    $region5: #{tpu_custom_call.1} parent=1 // loop_body
      %s38 = ssub.s32 %s33, 1
      %s39 = ssub.s32 %s33, 2
      %s46 = sadd.s32 1, %s41
      %p47 = scmp.ge.s32.totalorder %s46, 1
      %s48 = scalar_select %p47, 0, %s46
      %s49 = sadd.s32 1, %s40
      %s50 = scalar_select %p47, %s49, %s40
      %p51 = scmp.ge.s32.totalorder %s50, 2
      %s52 = scalar_select %p51, 0, %s50
      %s53 = ssub.s32 %s40, %s52
      %s54 = ssub.s32 %s41, %s48
      %s55 = sor.u32 %s53, %s54
      %p56 = scmp.eq.s32.totalorder %s55, 0
      %s58 = sadd.s32 %s57, 1
      %s59 = scalar_select %p56, %s57, %s58
      %p62 = pneg %p56
      %p63 = scmp.eq.s32.totalorder %s33, 1
      %p64 = por %p62, %p63
      %p65 = scmp.ne.s32.totalorder %s57, %s60
      %p66 = scmp.eq.s32.totalorder %s33, 0
      %p67 = por %p65, %p66
      %p68 = scmp.ne.s32.totalorder %s57, %s60
      %p69 = scmp.eq.s32.totalorder %s38, 1
      %p70 = por %p68, %p69
      %p71 = scmp.ne.s32.totalorder %s60, %s61
      %p72 = scmp.eq.s32.totalorder %s38, 0
      %p73 = por %p71, %p72
      %p74 = scmp.ne.s32.totalorder %s60, %s61
      %p75 = scmp.eq.s32.totalorder %s39, 1
      %p76 = por %p74, %p75
      %p78 = scmp.ne.s32.totalorder %s61, %s77
      %p79 = scmp.eq.s32.totalorder %s39, 0
      %p80 = por %p78, %p79
      %s81 = ssub.s32 %s40, %s52
      %s82 = ssub.s32 %s41, %s48
      %s83 = sor.u32 %s81, %s82
      %p84 = scmp.eq.s32.totalorder %s83, 0
      %s86 = sadd.s32 %s85, 1
      %s87 = scalar_select %p84, %s85, %s86
      %p90 = pneg %p84
      %p91 = scmp.eq.s32.totalorder %s33, 1
      %p92 = por %p90, %p91
      %p93 = scmp.ne.s32.totalorder %s85, %s88
      %p94 = scmp.eq.s32.totalorder %s33, 0
      %p95 = por %p93, %p94
      %p96 = scmp.ne.s32.totalorder %s85, %s88
      %p97 = scmp.eq.s32.totalorder %s38, 1
      %p98 = por %p96, %p97
      %p99 = scmp.ne.s32.totalorder %s88, %s89
      %p100 = scmp.eq.s32.totalorder %s38, 0
      %p101 = por %p99, %p100
      %p102 = scmp.ne.s32.totalorder %s88, %s89
      %p103 = scmp.eq.s32.totalorder %s39, 1
      %p104 = por %p102, %p103
      %p106 = scmp.ne.s32.totalorder %s89, %s105
      %p107 = scmp.eq.s32.totalorder %s39, 0
      %p108 = por %p106, %p107
      %s109 = ssub.s32 %s40, %s52
      %s110 = ssub.s32 %s41, %s48
      %s111 = sor.u32 %s109, %s110
      %p112 = scmp.eq.s32.totalorder %s111, 0
      %s114 = sadd.s32 %s113, 1
      %s115 = scalar_select %p112, %s113, %s114
      %p118 = pneg %p112
      %p119 = scmp.eq.s32.totalorder %s33, 1
      %p120 = por %p118, %p119
      %p121 = scmp.ne.s32.totalorder %s113, %s116
      %p122 = scmp.eq.s32.totalorder %s33, 0
      %p123 = por %p121, %p122
      %p124 = scmp.ne.s32.totalorder %s113, %s116
      %p125 = scmp.eq.s32.totalorder %s38, 1
      %p126 = por %p124, %p125
      %p127 = scmp.ne.s32.totalorder %s116, %s117
      %p128 = scmp.eq.s32.totalorder %s38, 0
      %p129 = por %p127, %p128
      %p130 = scmp.ne.s32.totalorder %s116, %s117
      %p131 = scmp.eq.s32.totalorder %s39, 1
      %p132 = por %p130, %p131
      %p134 = scmp.ne.s32.totalorder %s117, %s133
      %p135 = scmp.eq.s32.totalorder %s39, 0
      %p136 = por %p134, %p135
      %s138 = sadd.s32 %s137, 1
      %p141 = scmp.eq.s32.totalorder %s33, 1
      %p142 = scmp.ne.s32.totalorder %s137, %s139
      %p143 = scmp.eq.s32.totalorder %s33, 0
      %p144 = por %p142, %p143
      %p145 = scmp.ne.s32.totalorder %s137, %s139
      %p146 = scmp.eq.s32.totalorder %s38, 1
      %p147 = por %p145, %p146
      %p148 = scmp.ne.s32.totalorder %s139, %s140
      %p149 = scmp.eq.s32.totalorder %s38, 0
      %p150 = por %p148, %p149
      %p151 = scmp.ne.s32.totalorder %s139, %s140
      %p152 = scmp.eq.s32.totalorder %s39, 1
      %p153 = por %p151, %p152
      %p155 = scmp.ne.s32.totalorder %s140, %s154
      %p156 = scmp.eq.s32.totalorder %s39, 0
      %p157 = por %p155, %p156
      %s159 = sadd.s32 %s158, 1
      %p162 = scmp.eq.s32.totalorder %s33, 1
      %p163 = scmp.ne.s32.totalorder %s158, %s160
      %p164 = scmp.eq.s32.totalorder %s33, 0
      %p165 = por %p163, %p164
      %p166 = scmp.ne.s32.totalorder %s158, %s160
      %p167 = scmp.eq.s32.totalorder %s38, 1
      %p168 = por %p166, %p167
      %p169 = scmp.ne.s32.totalorder %s160, %s161
      %p170 = scmp.eq.s32.totalorder %s38, 0
      %p171 = por %p169, %p170
      %p172 = scmp.ne.s32.totalorder %s160, %s161
      %p173 = scmp.eq.s32.totalorder %s39, 1
      %p174 = por %p172, %p173
      %p176 = scmp.ne.s32.totalorder %s161, %s175
      %p177 = scmp.eq.s32.totalorder %s39, 0
      %p178 = por %p176, %p177
      %s180 = sadd.s32 %s179, 1
      %p183 = scmp.eq.s32.totalorder %s33, 1
      %p184 = scmp.ne.s32.totalorder %s179, %s181
      %p185 = scmp.eq.s32.totalorder %s33, 0
      %p186 = por %p184, %p185
      %p187 = scmp.ne.s32.totalorder %s179, %s181
      %p188 = scmp.eq.s32.totalorder %s38, 1
      %p189 = por %p187, %p188
      %p190 = scmp.ne.s32.totalorder %s181, %s182
      %p191 = scmp.eq.s32.totalorder %s38, 0
      %p192 = por %p190, %p191
      %p193 = scmp.ne.s32.totalorder %s181, %s182
      %p194 = scmp.eq.s32.totalorder %s39, 1
      %p195 = por %p193, %p194
      %p197 = scmp.ne.s32.totalorder %s182, %s196
      %p198 = scmp.eq.s32.totalorder %s39, 0
      %p199 = por %p197, %p198
      %s201 = sadd.s32 %s200, 1
      %p204 = scmp.eq.s32.totalorder %s33, 1
      %p205 = scmp.ne.s32.totalorder %s200, %s202
      %p206 = scmp.eq.s32.totalorder %s33, 0
      %p207 = por %p205, %p206
      %p208 = scmp.ne.s32.totalorder %s200, %s202
      %p209 = scmp.eq.s32.totalorder %s38, 1
      %p210 = por %p208, %p209
      %p211 = scmp.ne.s32.totalorder %s202, %s203
      %p212 = scmp.eq.s32.totalorder %s38, 0
      %p213 = por %p211, %p212
      %p214 = scmp.ne.s32.totalorder %s202, %s203
      %p215 = scmp.eq.s32.totalorder %s39, 1
      %p216 = por %p214, %p215
      %p218 = scmp.ne.s32.totalorder %s203, %s217
      %p219 = scmp.eq.s32.totalorder %s39, 0
      %p220 = por %p218, %p219
      %s222 = sadd.s32 %s221, 1
      %p225 = scmp.eq.s32.totalorder %s33, 1
      %p226 = scmp.ne.s32.totalorder %s221, %s223
      %p227 = scmp.eq.s32.totalorder %s33, 0
      %p228 = por %p226, %p227
      %p229 = scmp.ne.s32.totalorder %s221, %s223
      %p230 = scmp.eq.s32.totalorder %s38, 1
      %p231 = por %p229, %p230
      %p232 = scmp.ne.s32.totalorder %s223, %s224
      %p233 = scmp.eq.s32.totalorder %s38, 0
      %p234 = por %p232, %p233
      %p235 = scmp.ne.s32.totalorder %s223, %s224
      %p236 = scmp.eq.s32.totalorder %s39, 1
      %p237 = por %p235, %p236
      %p239 = scmp.ne.s32.totalorder %s224, %s238
      %p240 = scmp.eq.s32.totalorder %s39, 0
      %p241 = por %p239, %p240
      %s243 = sadd.s32 %s242, 1
      %p246 = scmp.eq.s32.totalorder %s33, 1
      %p247 = scmp.ne.s32.totalorder %s242, %s244
      %p248 = scmp.eq.s32.totalorder %s33, 0
      %p249 = por %p247, %p248
      %p250 = scmp.ne.s32.totalorder %s242, %s244
      %p251 = scmp.eq.s32.totalorder %s38, 1
      %p252 = por %p250, %p251
      %p253 = scmp.ne.s32.totalorder %s244, %s245
      %p254 = scmp.eq.s32.totalorder %s38, 0
      %p255 = por %p253, %p254
      %p256 = scmp.ne.s32.totalorder %s244, %s245
      %p257 = scmp.eq.s32.totalorder %s39, 1
      %p258 = por %p256, %p257
      %p260 = scmp.ne.s32.totalorder %s245, %s259
      %p261 = scmp.eq.s32.totalorder %s39, 0
      %p262 = por %p260, %p261
      %s264 = sadd.s32 %s263, 1
      %p267 = scmp.eq.s32.totalorder %s33, 1
      %p268 = scmp.ne.s32.totalorder %s263, %s265
      %p269 = scmp.eq.s32.totalorder %s33, 0
      %p270 = por %p268, %p269
      %p271 = scmp.ne.s32.totalorder %s263, %s265
      %p272 = scmp.eq.s32.totalorder %s38, 1
      %p273 = por %p271, %p272
      %p274 = scmp.ne.s32.totalorder %s265, %s266
      %p275 = scmp.eq.s32.totalorder %s38, 0
      %p276 = por %p274, %p275
      %p277 = scmp.ne.s32.totalorder %s265, %s266
      %p278 = scmp.eq.s32.totalorder %s39, 1
      %p279 = por %p277, %p278
      %p281 = scmp.ne.s32.totalorder %s266, %s280
      %p282 = scmp.eq.s32.totalorder %s39, 0
      %p283 = por %p281, %p282
      %s285 = sadd.s32 %s284, 1
      %p288 = scmp.eq.s32.totalorder %s33, 1
      %p289 = scmp.ne.s32.totalorder %s284, %s286
      %p290 = scmp.eq.s32.totalorder %s33, 0
      %p291 = por %p289, %p290
      %p292 = scmp.ne.s32.totalorder %s284, %s286
      %p293 = scmp.eq.s32.totalorder %s38, 1
      %p294 = por %p292, %p293
      %p295 = scmp.ne.s32.totalorder %s286, %s287
      %p296 = scmp.eq.s32.totalorder %s38, 0
      %p297 = por %p295, %p296
      %p298 = scmp.ne.s32.totalorder %s286, %s287
      %p299 = scmp.eq.s32.totalorder %s39, 1
      %p300 = por %p298, %p299
      %p302 = scmp.ne.s32.totalorder %s287, %s301
      %p303 = scmp.eq.s32.totalorder %s39, 0
      %p304 = por %p302, %p303
      %s305 = ssub.s32 %s40, %s52
      %s306 = ssub.s32 %s41, %s48
      %s307 = sor.u32 %s305, %s306
      %p308 = scmp.eq.s32.totalorder %s307, 0
      %s310 = sadd.s32 %s309, 1
      %s311 = scalar_select %p308, %s309, %s310
      %p314 = pneg %p308
      %p315 = scmp.eq.s32.totalorder %s33, 1
      %p316 = por %p314, %p315
      %p317 = scmp.ne.s32.totalorder %s309, %s312
      %p318 = scmp.eq.s32.totalorder %s33, 0
      %p319 = por %p317, %p318
      %p320 = scmp.ne.s32.totalorder %s309, %s312
      %p321 = scmp.eq.s32.totalorder %s38, 1
      %p322 = por %p320, %p321
      %p323 = scmp.ne.s32.totalorder %s312, %s313
      %p324 = scmp.eq.s32.totalorder %s38, 0
      %p325 = por %p323, %p324
      %p326 = scmp.ne.s32.totalorder %s312, %s313
      %p327 = scmp.eq.s32.totalorder %s39, 1
      %p328 = por %p326, %p327
      %p330 = scmp.ne.s32.totalorder %s313, %s329
      %p331 = scmp.eq.s32.totalorder %s39, 0
      %p332 = por %p330, %p331
      %s333 = ssub.s32 %s40, %s52
      %s334 = ssub.s32 %s41, %s48
      %s335 = sor.u32 %s333, %s334
      %p336 = scmp.eq.s32.totalorder %s335, 0
      %s338 = sadd.s32 %s337, 1
      %s339 = scalar_select %p336, %s337, %s338
      %p342 = pneg %p336
      %p343 = scmp.eq.s32.totalorder %s33, 1
      %p344 = por %p342, %p343
      %p345 = scmp.ne.s32.totalorder %s337, %s340
      %p346 = scmp.eq.s32.totalorder %s33, 0
      %p347 = por %p345, %p346
      %p348 = scmp.ne.s32.totalorder %s337, %s340
      %p349 = scmp.eq.s32.totalorder %s38, 1
      %p350 = por %p348, %p349
      %p351 = scmp.ne.s32.totalorder %s340, %s341
      %p352 = scmp.eq.s32.totalorder %s38, 0
      %p353 = por %p351, %p352
      %p354 = scmp.ne.s32.totalorder %s340, %s341
      %p355 = scmp.eq.s32.totalorder %s39, 1
      %p356 = por %p354, %p355
      %p358 = scmp.ne.s32.totalorder %s341, %s357
      %p359 = scmp.eq.s32.totalorder %s39, 0
      %p360 = por %p358, %p359
      %p361 = scmp.le.s32.totalorder 1, %s33
      %p362 = scmp.lt.s32.totalorder %s33, 3
      %p363 = pnand %p361, %p362
      %p364 = pneg %p363
      // Predicated region
      $region9: #{tpu_custom_call.1} parent=5 // pred_check
        _
      $region10: #{tpu_custom_call.1} parent=5 // pred_check_branch
        %366 = sbr.rel (%p363) target = $region12
      $region11: #{tpu_custom_call.1} parent=5 // pred_region
        %s367 = ssub.s32 %s33, 1
        // Predicated region
        $region13: #{tpu_custom_call.1} parent=11 // pred_check
          %p368 = pneg %p150
        $region14: #{tpu_custom_call.1} parent=11 // pred_check_branch
          %370 = sbr.rel (%p368) target = $region16
        $region15: #{tpu_custom_call.1} parent=11 // pred_region
          %s372 = ssub.s32 64, 64
          %373 = vsyncadd [#allocation7], %s372
          %s375 = sshll.u32 [#allocation8], 4
          %s376 = int_to_ptr.vmem [resolvable:$true] %s375
          %378 = dma.hbm_to_vmem [thread:$0]  %s3, 64, %s376, [#allocation7]
        $region16: #{tpu_custom_call.1} parent=11 // pred_fallthru
          _
        // Predicated region
        $region17: #{tpu_custom_call.1} parent=11 // pred_check
          %p379 = pneg %p171
        $region18: #{tpu_custom_call.1} parent=11 // pred_check_branch
          %381 = sbr.rel (%p379) target = $region20
        $region19: #{tpu_custom_call.1} parent=11 // pred_region
          %s383 = ssub.s32 128, 128
          %384 = vsyncadd [#allocation10], %s383
          %s385 = sshll.u32 [#allocation9], 4
          %s386 = int_to_ptr.vmem [resolvable:$true] %s385
          %391 = dma.hbm_to_vmem [thread:$0]  %s4, 128, %s386, [#allocation10], 64, 64, 4
        $region20: #{tpu_custom_call.1} parent=11 // pred_fallthru
          _
        // Predicated region
        $region21: #{tpu_custom_call.1} parent=11 // pred_check
          %p392 = pneg %p192
        $region22: #{tpu_custom_call.1} parent=11 // pred_check_branch
          %394 = sbr.rel (%p392) target = $region24
        $region23: #{tpu_custom_call.1} parent=11 // pred_region
          %s396 = ssub.s32 256, 256
          %397 = vsyncadd [#allocation10], %s396
          %s398 = sshll.u32 [#allocation11], 4
          %s399 = int_to_ptr.vmem [resolvable:$true] %s398
          %404 = dma.hbm_to_vmem [thread:$0]  %s5, 256, %s399, [#allocation10], 64, 64, 4
        $region24: #{tpu_custom_call.1} parent=11 // pred_fallthru
          _
        // Predicated region
        $region25: #{tpu_custom_call.1} parent=11 // pred_check
          %p405 = pneg %p213
        $region26: #{tpu_custom_call.1} parent=11 // pred_check_branch
          %407 = sbr.rel (%p405) target = $region28
        $region27: #{tpu_custom_call.1} parent=11 // pred_region
          _
        $region28: #{tpu_custom_call.1} parent=11 // pred_fallthru
          _
        // Predicated region
        $region29: #{tpu_custom_call.1} parent=11 // pred_check
          %p408 = pneg %p234
        $region30: #{tpu_custom_call.1} parent=11 // pred_check_branch
          %410 = sbr.rel (%p408) target = $region32
        $region31: #{tpu_custom_call.1} parent=11 // pred_region
          _
        $region32: #{tpu_custom_call.1} parent=11 // pred_fallthru
          _
        // Predicated region
        $region33: #{tpu_custom_call.1} parent=11 // pred_check
          %p411 = pneg %p255
        $region34: #{tpu_custom_call.1} parent=11 // pred_check_branch
          %413 = sbr.rel (%p411) target = $region36
        $region35: #{tpu_custom_call.1} parent=11 // pred_region
          _
        $region36: #{tpu_custom_call.1} parent=11 // pred_fallthru
          _
        // Predicated region
        $region37: #{tpu_custom_call.1} parent=11 // pred_check
          %p414 = pneg %p276
        $region38: #{tpu_custom_call.1} parent=11 // pred_check_branch
          %416 = sbr.rel (%p414) target = $region40
        $region39: #{tpu_custom_call.1} parent=11 // pred_region
          _
        $region40: #{tpu_custom_call.1} parent=11 // pred_fallthru
          _
        // Predicated region
        $region41: #{tpu_custom_call.1} parent=11 // pred_check
          %p417 = pneg %p297
        $region42: #{tpu_custom_call.1} parent=11 // pred_check_branch
          %419 = sbr.rel (%p417) target = $region44
        $region43: #{tpu_custom_call.1} parent=11 // pred_region
          _
        $region44: #{tpu_custom_call.1} parent=11 // pred_fallthru
          _
      $region12: #{tpu_custom_call.1} parent=5 // pred_fallthru
        _
      %p420 = scmp.lt.s32.totalorder %s33, 2
      // Predicated region
      $region45: #{tpu_custom_call.1} parent=5 // pred_check
        %p421 = pneg %p420
      $region46: #{tpu_custom_call.1} parent=5 // pred_check_branch
        %423 = sbr.rel (%p421) target = $region48
      $region47: #{tpu_custom_call.1} parent=5 // pred_region
        // Predicated region
        $region49: #{tpu_custom_call.1} parent=47 // pred_check
          %p424 = pneg %p67
        $region50: #{tpu_custom_call.1} parent=47 // pred_check_branch
          %426 = sbr.rel (%p424) target = $region52
        $region51: #{tpu_custom_call.1} parent=47 // pred_region
          %s427 = sand.u32 %s57, 1
          %s428 = scalar_lea.sflag [#allocation4], %s427
          %s429 = sand.u32 %s57, 1
          %s430 = smul.addr %s429, 8
          %s431 = scalar_lea.vmem [#allocation3], %s430
          %s432 = smul.u32 2, %s41
          %s434 = ssub.s32 128, 128
          %435 = vsyncadd %s428, %s434
          %s436 = smul.addr %s40, 2
          %s437 = sadd.s32 %s432, %s436
          %s438 = smul.addr %s437, 64
          %s439 = scalar_lea.hbm %s0, %s438
          %s441 = sshll.u32 %s431, 4
          %s442 = int_to_ptr.vmem [resolvable:$true] %s441
          %444 = dma.hbm_to_vmem [thread:$0]  %s439, 128, %s442, %s428
        $region52: #{tpu_custom_call.1} parent=47 // pred_fallthru
          _
        // Predicated region
        $region53: #{tpu_custom_call.1} parent=47 // pred_check
          %p445 = pneg %p95
        $region54: #{tpu_custom_call.1} parent=47 // pred_check_branch
          %447 = sbr.rel (%p445) target = $region56
        $region55: #{tpu_custom_call.1} parent=47 // pred_region
          %s448 = sand.u32 %s33, 1
          %s449 = scalar_lea.sflag [#allocation7], %s448
          %s450 = sand.u32 %s85, 1
          %s451 = smul.addr %s450, 16
          %s452 = scalar_lea.vmem [#allocation6], %s451
          %s453 = smul.u32 2, %s41
          %s455 = ssub.s32 256, 256
          %456 = vsyncadd %s449, %s455
          %s457 = smul.addr %s40, 4
          %s458 = sadd.s32 %s453, %s457
          %s459 = smul.addr %s458, 64
          %s460 = scalar_lea.hbm %s1, %s459
          %s461 = sshll.u32 %s452, 4
          %s462 = int_to_ptr.vmem [resolvable:$true] %s461
          %467 = dma.hbm_to_vmem [thread:$0]  %s460, 256, %s462, %s449, 128, 128, 8
        $region56: #{tpu_custom_call.1} parent=47 // pred_fallthru
          _
        // Predicated region
        $region57: #{tpu_custom_call.1} parent=47 // pred_check
          %p468 = pneg %p123
        $region58: #{tpu_custom_call.1} parent=47 // pred_check_branch
          %470 = sbr.rel (%p468) target = $region60
        $region59: #{tpu_custom_call.1} parent=47 // pred_region
          %s471 = smul.u32 2, %s41
          %p472 = scmp.lt.s32.totalorder %s40, 1
          %s473 = scalar_select %p472, %s40, 1
          %p474 = scmp.lt.s32.totalorder %s471, 1
          %s475 = scalar_select %p474, %s471, 1
          %s476 = smul.addr %s473, 8
          %s477 = sadd.s32 %s475, %s476
          %s478 = smul.addr %s477, 4
          %s479 = scalar_lea.vmem %s2, %s478
          %s480 = smul.u32 2, %s41
        $region60: #{tpu_custom_call.1} parent=47 // pred_fallthru
          _
      $region48: #{tpu_custom_call.1} parent=5 // pred_fallthru
        _
      %p481 = scmp.le.s32.totalorder 1, %s33
      %p482 = scmp.lt.s32.totalorder %s33, 3
      %p483 = pnand %p481, %p482
      %p484 = pneg %p483
      // Predicated region
      $region61: #{tpu_custom_call.1} parent=5 // pred_check
        _
      $region62: #{tpu_custom_call.1} parent=5 // pred_check_branch
        %486 = sbr.rel (%p483) target = $region64
      $region63: #{tpu_custom_call.1} parent=5 // pred_region
        %s487 = ssub.s32 %s33, 1
        %s488 = sand.u32 %s60, 1
        %s489 = scalar_lea.sflag [#allocation4], %s488
        %s490 = sand.u32 %s60, 1
        %s491 = smul.addr %s490, 8
        %s492 = scalar_lea.vmem [#allocation3], %s491
        // Predicated region
        $region65: #{tpu_custom_call.1} parent=63 // pred_check
          %p493 = pneg %p73
        $region66: #{tpu_custom_call.1} parent=63 // pred_check_branch
          %495 = sbr.rel (%p493) target = $region68
        $region67: #{tpu_custom_call.1} parent=63 // pred_region
          %496 = dma.done %s489, 128
        $region68: #{tpu_custom_call.1} parent=63 // pred_fallthru
          _
        %s497 = sand.u32 %s38, 1
        %s498 = scalar_lea.sflag [#allocation7], %s497
        %s499 = sand.u32 %s88, 1
        %s500 = smul.addr %s499, 16
        %s501 = scalar_lea.vmem [#allocation6], %s500
        // Predicated region
        $region69: #{tpu_custom_call.1} parent=63 // pred_check
          %p502 = pneg %p101
        $region70: #{tpu_custom_call.1} parent=63 // pred_check_branch
          %504 = sbr.rel (%p502) target = $region72
        $region71: #{tpu_custom_call.1} parent=63 // pred_region
          %505 = dma.done %s498, 256
        $region72: #{tpu_custom_call.1} parent=63 // pred_fallthru
          _
        // Predicated region
        $region73: #{tpu_custom_call.1} parent=63 // pred_check
          %p506 = pneg %p150
        $region74: #{tpu_custom_call.1} parent=63 // pred_check_branch
          %508 = sbr.rel (%p506) target = $region76
        $region75: #{tpu_custom_call.1} parent=63 // pred_region
          %509 = dma.done [#allocation7], 64
        $region76: #{tpu_custom_call.1} parent=63 // pred_fallthru
          _
        // Predicated region
        $region77: #{tpu_custom_call.1} parent=63 // pred_check
          %p510 = pneg %p171
        $region78: #{tpu_custom_call.1} parent=63 // pred_check_branch
          %512 = sbr.rel (%p510) target = $region80
        $region79: #{tpu_custom_call.1} parent=63 // pred_region
          %513 = dma.done [#allocation10], 128
        $region80: #{tpu_custom_call.1} parent=63 // pred_fallthru
          _
        // Predicated region
        $region81: #{tpu_custom_call.1} parent=63 // pred_check
          %p514 = pneg %p192
        $region82: #{tpu_custom_call.1} parent=63 // pred_check_branch
          %516 = sbr.rel (%p514) target = $region84
        $region83: #{tpu_custom_call.1} parent=63 // pred_region
          %517 = dma.done [#allocation10], 256
        $region84: #{tpu_custom_call.1} parent=63 // pred_fallthru
          _
        %s518 = sand.u32 %s60, 1
        %s519 = scalar_lea.sflag [#allocation4], %s518
        %s520 = sand.u32 %s60, 1
        %s521 = smul.addr %s520, 8
        %s522 = scalar_lea.vmem [#allocation3], %s521
        %p523 = pneg %p73
        %p524 = pneg %p70
        %s525 = sand.u32 %s38, 1
        %s526 = scalar_lea.sflag [#allocation7], %s525
        %s527 = sand.u32 %s88, 1
        %s528 = smul.addr %s527, 16
        %s529 = scalar_lea.vmem [#allocation6], %s528
        %p530 = pneg %p101
        %p531 = pneg %p98
        %s532 = smul.u32 2, %s43
        %p533 = scmp.lt.s32.totalorder %s42, 1
        %s534 = scalar_select %p533, %s42, 1
        %p535 = scmp.lt.s32.totalorder %s532, 1
        %s536 = scalar_select %p535, %s532, 1
        %s537 = smul.addr %s534, 8
        %s538 = sadd.s32 %s536, %s537
        %s539 = smul.addr %s538, 4
        %s540 = scalar_lea.vmem %s2, %s539
        %p541 = pneg %p129
        %p542 = pneg %p126
        %p543 = pneg %p150
        %p544 = pneg %p147
        %p545 = pneg %p171
        %p546 = pneg %p168
        %p547 = pneg %p192
        %p548 = pneg %p189
        %p549 = pneg %p213
        %p550 = pneg %p210
        %p551 = pneg %p234
        %p552 = pneg %p231
        %p553 = pneg %p255
        %p554 = pneg %p252
        %p555 = pneg %p276
        %p556 = pneg %p273
        %p557 = pneg %p297
        %p558 = pneg %p294
        %p559 = pneg %p325
        %p560 = pneg %p322
        %s561 = sand.u32 %s312, 1
        %s562 = scalar_lea.sflag [#allocation5], %s561
        %s563 = sand.u32 %s312, 1
        %s564 = smul.addr %s563, 56
        %s565 = scalar_lea.vmem [#allocation12], %s564
        %p566 = pneg %p353
        %p567 = pneg %p350
        %s568 = sand.u32 %s340, 1
        %s569 = scalar_lea.sflag [#allocation14], %s568
        %s570 = sand.u32 %s340, 1
        %s571 = smul.addr %s570, 2
        %s572 = scalar_lea.vmem [#allocation13], %s571
        %s573 = smul.u32 2, %s43
        %s574 = smul.u32 2, %s43
        %s575 = smul.u32 2, %s43
        %p576 = scmp.lt.s32.totalorder %s42, 1
        %s577 = scalar_select %p576, %s42, 1
        %p578 = scmp.lt.s32.totalorder %s575, 1
        %s579 = scalar_select %p578, %s575, 1
        %s580 = smul.addr %s577, 8
        %s581 = sadd.s32 %s579, %s580
        %s582 = smul.addr %s581, 4
        %s583 = scalar_lea.vmem %s2, %s582
        %s584 = smul.u32 2, %s43
        %s585 = smul.u32 2, %s43
        %s586 = smul.u32 2, %s43
        %v588 = vld [vmem:[%s492] sm:$0xff]
        %v589 = vld [vmem:[#allocation8] sm:$0xf]
        %v590 = vld [vmem:[%s6] sm:$0xff]
        %592 = vset.pattern.permute.xlu0 0
        %593 = vperm.xlu0 %592, %v590
        %v594 = vpop.permute.xlu0 %593
        %v597 = vunpack.c.l.b16 %v588
        %v598 = vunpack.c.h.b16 %v588
        %v599 = vpack.c.b16 %v597, %v597
        %v600 = vpack.c.b16 %v598, %v598
        %vm601 = vcmask 64512
        %v603 = vsel %vm601, %v589, 0
        %vm605 = vcmask 1043456
        %v607 = vsel %vm605, %v599, 0
        %v610 = vsel %vm605, %v600, 0
        %612 = vmatprep.subr.bf16.mxu0 0
        %613 = vmatpush1.bf16.msra.mxu0 0
        %614 = vmatprep.subr.bf16.mxu0 0
        %615 = vmatpush1.bf16.msra.mxu0 0
        %616 = vmatprep.subr.bf16.mxu0 0
        %617 = vmatpush1.bf16.msra.mxu0 0
        %618 = vmatprep.subr.bf16.mxu0 0
        %619 = vmatpush1.bf16.msra.mxu0 0
        %620 = vmatprep.subr.bf16.mxu0 0
        %621 = vmatpush1.bf16.msra.mxu0 0
        %622 = vmatprep.subr.bf16.mxu0 0
        %623 = vmatpush1.bf16.msra.mxu0 0
        %624 = vmatprep.subr.bf16.mxu0 0
        %625 = vmatpush1.bf16.msra.mxu0 0
        %626 = vmatprep.subr.bf16.mxu0 %v610
        %627 = vmatpush1.bf16.msra.mxu0 %v607
        %628 = vmatprep.subr.bf16.mxu0 0
        %629 = vmatpush2.bf16.msra.mxu0 0
        %630 = vmatprep.subr.bf16.mxu0 0
        %631 = vmatpush2.bf16.msra.mxu0 0
        %632 = vmatprep.subr.bf16.mxu0 0
        %633 = vmatpush2.bf16.msra.mxu0 0
        %634 = vmatprep.subr.bf16.mxu0 0
        %635 = vmatpush2.bf16.msra.mxu0 0
        %636 = vmatprep.subr.bf16.mxu0 0
        %637 = vmatpush2.bf16.msra.mxu0 0
        %638 = vmatprep.subr.bf16.mxu0 0
        %639 = vmatpush2.bf16.msra.mxu0 0
        %640 = vmatprep.subr.bf16.mxu0 0
        %641 = vmatpush2.bf16.msra.mxu0 0
        %642 = vmatprep.subr.bf16.mxu0 0
        %643 = vmatpush2.bf16.msra.mxu0 0
        %644 = vmatprep.mubr.bf16.mxu0 0
        %645 = vmatmul.mubr.bf16.gmra.mxu0 %v603
        %v646 = vpop.f32.mrf.mxu0
        %v647 = vadd.f32 %v594, %v646
        %v648 = vpop.f32.mrf.mxu0
        %v649 = vadd.f32 %v594, %v648
        %v650 = vpop.f32.mrf.mxu0
        %v651 = vpop.f32.mrf.mxu0
        %652 = vdwg.mxu0
        %v653 = vunpack.c.l.bf16 %v588
        %v654 = vunpack.c.h.bf16 %v588
        %v655 = vadd.f32 %v647, %v653
        %v656 = vadd.f32 %v649, %v654
        %v657 = vmax.f32 %v655, 0.0
        %v658 = vmax.f32 %v656, 0.0
        %v659 = vld [vmem:[%s501] sm:$0xff]
        %v660 = vld [vmem:[%s501 + $0x8] sm:$0xff]
        %v661 = vld [vmem:[#allocation9] sm:$0xf]
        %v662 = vld [vmem:[#allocation9 + $0x4] sm:$0xf]
        %v663 = vld [vmem:[%s7] sm:$0xff]
        %v664 = vld [vmem:[%s7 + $0x8] sm:$0xff]
        %666 = vset.pattern.permute.xlu0 0
        %667 = vperm.xlu0 %666, %v663
        %v668 = vpop.permute.xlu0 %667
        %671 = vset.pattern.permute.xlu0 0
        %672 = vperm.xlu0 %671, %v664
        %v673 = vpop.permute.xlu0 %672
        %v677 = vunpack.c.l.b16 %v661
        %v678 = vunpack.c.l.b16 %v662
        %v679 = vpack.c.b16 %v678, %v677
        %v682 = vunpack.c.l.b16 %v659
        %v683 = vunpack.c.h.b16 %v659
        %v684 = vunpack.c.l.b16 %v660
        %v685 = vunpack.c.h.b16 %v660
        %v686 = vpack.c.b16 %v684, %v682
        %v687 = vpack.c.b16 %v685, %v683
        %vm690 = vcmask 130048
        %v692 = vsel %vm690, %v679, 0
        %694 = vmatprep.subr.bf16.mxu0 0
        %695 = vmatpush1.bf16.msra.mxu0 0
        %696 = vmatprep.subr.bf16.mxu0 0
        %697 = vmatpush1.bf16.msra.mxu0 0
        %698 = vmatprep.subr.bf16.mxu0 0
        %699 = vmatpush1.bf16.msra.mxu0 0
        %700 = vmatprep.subr.bf16.mxu0 0
        %701 = vmatpush1.bf16.msra.mxu0 0
        %702 = vmatprep.subr.bf16.mxu0 0
        %703 = vmatpush1.bf16.msra.mxu0 0
        %704 = vmatprep.subr.bf16.mxu0 0
        %705 = vmatpush1.bf16.msra.mxu0 0
        %706 = vmatprep.subr.bf16.mxu0 0
        %707 = vmatpush1.bf16.msra.mxu0 0
        %708 = vmatprep.subr.bf16.mxu0 %v687
        %709 = vmatpush1.bf16.msra.mxu0 %v686
        %710 = vmatprep.subr.bf16.mxu0 0
        %711 = vmatpush2.bf16.msra.mxu0 0
        %712 = vmatprep.subr.bf16.mxu0 0
        %713 = vmatpush2.bf16.msra.mxu0 0
        %714 = vmatprep.subr.bf16.mxu0 0
        %715 = vmatpush2.bf16.msra.mxu0 0
        %716 = vmatprep.subr.bf16.mxu0 0
        %717 = vmatpush2.bf16.msra.mxu0 0
        %718 = vmatprep.subr.bf16.mxu0 0
        %719 = vmatpush2.bf16.msra.mxu0 0
        %720 = vmatprep.subr.bf16.mxu0 0
        %721 = vmatpush2.bf16.msra.mxu0 0
        %722 = vmatprep.subr.bf16.mxu0 0
        %723 = vmatpush2.bf16.msra.mxu0 0
        %724 = vmatprep.subr.bf16.mxu0 0
        %725 = vmatpush2.bf16.msra.mxu0 0
        %726 = vmatprep.mubr.bf16.mxu0 0
        %727 = vmatmul.mubr.bf16.gmra.mxu0 %v692
        %v728 = vpop.f32.mrf.mxu0
        %v729 = vadd.f32 %v668, %v728
        %v730 = vpop.f32.mrf.mxu0
        %v731 = vadd.f32 %v668, %v730
        %v732 = vpop.f32.mrf.mxu0
        %v733 = vadd.f32 %v673, %v732
        %v734 = vpop.f32.mrf.mxu0
        %v735 = vadd.f32 %v673, %v734
        %736 = vdwg.mxu0
        %v737 = vunpack.c.l.bf16 %v659
        %v738 = vunpack.c.h.bf16 %v659
        %v739 = vunpack.c.l.bf16 %v660
        %v740 = vunpack.c.h.bf16 %v660
        %v741 = vadd.f32 %v729, %v737
        %v742 = vadd.f32 %v731, %v738
        %v743 = vadd.f32 %v733, %v739
        %v744 = vadd.f32 %v735, %v740
        %v745 = vmax.f32 %v741, 0.0
        %v746 = vmax.f32 %v742, 0.0
        %v747 = vmax.f32 %v743, 0.0
        %v748 = vmax.f32 %v744, 0.0
        %v749 = vld [vmem:[%s583] sm:$0xff]
        %v750 = vld [vmem:[%s583 + $0x8] sm:$0xff]
        %v751 = vld [vmem:[%s583 + $0x10] sm:$0xff]
        %v752 = vld [vmem:[%s583 + $0x18] sm:$0xff]
        %v753 = vld [vmem:[#allocation11] sm:$0xf]
        %v754 = vld [vmem:[#allocation11 + $0x4] sm:$0xf]
        %v755 = vld [vmem:[#allocation11 + $0x8] sm:$0xf]
        %v756 = vld [vmem:[#allocation11 + $0xc] sm:$0xf]
        %v757 = vld [vmem:[%s8] sm:$0xff]
        %v758 = vld [vmem:[%s8 + $0x8] sm:$0xff]
        %v759 = vld [vmem:[%s8 + $0x10] sm:$0xff]
        %v760 = vld [vmem:[%s8 + $0x18] sm:$0xff]
        %762 = vset.pattern.permute.xlu0 0
        %763 = vperm.xlu0 %762, %v757
        %v764 = vpop.permute.xlu0 %763
        %767 = vset.pattern.permute.xlu0 0
        %768 = vperm.xlu0 %767, %v758
        %v769 = vpop.permute.xlu0 %768
        %772 = vset.pattern.permute.xlu0 0
        %773 = vperm.xlu0 %772, %v759
        %v774 = vpop.permute.xlu0 %773
        %777 = vset.pattern.permute.xlu0 0
        %778 = vperm.xlu0 %777, %v760
        %v779 = vpop.permute.xlu0 %778
        %v785 = vunpack.c.l.b16 %v753
        %v786 = vunpack.c.l.b16 %v754
        %v787 = vunpack.c.l.b16 %v755
        %v788 = vunpack.c.l.b16 %v756
        %v789 = vpack.c.b16 %v786, %v785
        %v790 = vpack.c.b16 %v788, %v787
        %v795 = vunpack.c.l.b16 %v749
        %v796 = vunpack.c.h.b16 %v749
        %v797 = vunpack.c.l.b16 %v750
        %v798 = vunpack.c.h.b16 %v750
        %v799 = vunpack.c.l.b16 %v751
        %v800 = vunpack.c.h.b16 %v751
        %v801 = vunpack.c.l.b16 %v752
        %v802 = vunpack.c.h.b16 %v752
        %v803 = vpack.c.b16 %v797, %v795
        %v804 = vpack.c.b16 %v798, %v796
        %v805 = vpack.c.b16 %v801, %v799
        %v806 = vpack.c.b16 %v802, %v800
        %vm811 = vcmask 261120
        %v813 = vsel %vm811, %v789, 0
        %v816 = vsel %vm811, %v790, 0
        %818 = vmatprep.subr.bf16.mxu0 0
        %819 = vmatpush1.bf16.msra.mxu0 0
        %820 = vmatprep.subr.bf16.mxu0 0
        %821 = vmatpush1.bf16.msra.mxu0 0
        %822 = vmatprep.subr.bf16.mxu0 0
        %823 = vmatpush1.bf16.msra.mxu0 0
        %824 = vmatprep.subr.bf16.mxu0 0
        %825 = vmatpush1.bf16.msra.mxu0 0
        %826 = vmatprep.subr.bf16.mxu0 0
        %827 = vmatpush1.bf16.msra.mxu0 0
        %828 = vmatprep.subr.bf16.mxu0 0
        %829 = vmatpush1.bf16.msra.mxu0 0
        %830 = vmatprep.subr.bf16.mxu0 %v806
        %831 = vmatpush1.bf16.msra.mxu0 %v805
        %832 = vmatprep.subr.bf16.mxu0 %v804
        %833 = vmatpush1.bf16.msra.mxu0 %v803
        %834 = vmatprep.subr.bf16.mxu0 0
        %835 = vmatpush2.bf16.msra.mxu0 0
        %836 = vmatprep.subr.bf16.mxu0 0
        %837 = vmatpush2.bf16.msra.mxu0 0
        %838 = vmatprep.subr.bf16.mxu0 0
        %839 = vmatpush2.bf16.msra.mxu0 0
        %840 = vmatprep.subr.bf16.mxu0 0
        %841 = vmatpush2.bf16.msra.mxu0 0
        %842 = vmatprep.subr.bf16.mxu0 0
        %843 = vmatpush2.bf16.msra.mxu0 0
        %844 = vmatprep.subr.bf16.mxu0 0
        %845 = vmatpush2.bf16.msra.mxu0 0
        %846 = vmatprep.subr.bf16.mxu0 0
        %847 = vmatpush2.bf16.msra.mxu0 0
        %848 = vmatprep.subr.bf16.mxu0 0
        %849 = vmatpush2.bf16.msra.mxu0 0
        %850 = vmatprep.mubr.bf16.mxu0 0
        %851 = vmatmul.mubr.bf16.gmra.mxu0 %v813
        %v852 = vpop.f32.mrf.mxu0
        %v853 = vadd.f32 %v764, %v852
        %v854 = vpop.f32.mrf.mxu0
        %v855 = vadd.f32 %v764, %v854
        %v856 = vpop.f32.mrf.mxu0
        %v857 = vadd.f32 %v769, %v856
        %v858 = vpop.f32.mrf.mxu0
        %v859 = vadd.f32 %v769, %v858
        %860 = vmatprep.mubr.bf16.mxu0 0
        %861 = vmatmul.mubr.bf16.gmra.mxu0 %v816
        %v862 = vpop.f32.mrf.mxu0
        %v863 = vadd.f32 %v774, %v862
        %v864 = vpop.f32.mrf.mxu0
        %v865 = vadd.f32 %v774, %v864
        %v866 = vpop.f32.mrf.mxu0
        %v867 = vadd.f32 %v779, %v866
        %v868 = vpop.f32.mrf.mxu0
        %v869 = vadd.f32 %v779, %v868
        %870 = vdwg.mxu0
        %v871 = vunpack.c.l.bf16 %v749
        %v872 = vunpack.c.h.bf16 %v749
        %v873 = vunpack.c.l.bf16 %v750
        %v874 = vunpack.c.h.bf16 %v750
        %v875 = vunpack.c.l.bf16 %v751
        %v876 = vunpack.c.h.bf16 %v751
        %v877 = vunpack.c.l.bf16 %v752
        %v878 = vunpack.c.h.bf16 %v752
        %v879 = vadd.f32 %v853, %v871
        %v880 = vadd.f32 %v855, %v872
        %v881 = vadd.f32 %v857, %v873
        %v882 = vadd.f32 %v859, %v874
        %v883 = vadd.f32 %v863, %v875
        %v884 = vadd.f32 %v865, %v876
        %v885 = vadd.f32 %v867, %v877
        %v886 = vadd.f32 %v869, %v878
        %v887 = vmax.f32 %v879, 0.0
        %v888 = vmax.f32 %v880, 0.0
        %v889 = vmax.f32 %v881, 0.0
        %v890 = vmax.f32 %v882, 0.0
        %v891 = vmax.f32 %v883, 0.0
        %v892 = vmax.f32 %v884, 0.0
        %v893 = vmax.f32 %v885, 0.0
        %v894 = vmax.f32 %v886, 0.0
        %v895 = vpack.c.bf16 %v745, %v657
        %v896 = vpack.c.bf16 %v746, %v658
        %v897 = vpack.c.bf16 %v887, %v747
        %v898 = vpack.c.bf16 %v888, %v748
        %v899 = vpack.c.bf16 %v891, %v889
        %v900 = vpack.c.bf16 %v892, %v890
        %v901 = vpack.c.bf16 %v893, %v893
        %v902 = vpack.c.bf16 %v894, %v894
        %v911 = vunpack.c.l.b16 %v895
        %v912 = vunpack.c.l.b16 %v896
        %v913 = vunpack.c.h.b16 %v895
        %v914 = vunpack.c.h.b16 %v896
        %v915 = vunpack.c.l.b16 %v897
        %v916 = vunpack.c.l.b16 %v898
        %v917 = vunpack.c.h.b16 %v897
        %v918 = vunpack.c.h.b16 %v898
        %v919 = vunpack.c.l.b16 %v899
        %v920 = vunpack.c.l.b16 %v900
        %v921 = vunpack.c.h.b16 %v899
        %v922 = vunpack.c.h.b16 %v900
        %v923 = vunpack.c.l.b16 %v901
        %v924 = vunpack.c.l.b16 %v902
        %v925 = vpack.c.b16 %v912, %v911
        %v926 = vpack.c.b16 %v914, %v913
        %v927 = vpack.c.b16 %v916, %v915
        %v928 = vpack.c.b16 %v918, %v917
        %v929 = vpack.c.b16 %v920, %v919
        %v930 = vpack.c.b16 %v922, %v921
        %v931 = vpack.c.b16 %v924, %v923
        %939 = vst [vmem:[%s565] sm:$0xff] %v925
        %940 = vst [vmem:[%s565 + $0x8] sm:$0xff] %v926
        %941 = vst [vmem:[%s565 + $0x10] sm:$0xff] %v927
        %942 = vst [vmem:[%s565 + $0x18] sm:$0xff] %v928
        %943 = vst [vmem:[%s565 + $0x20] sm:$0xff] %v929
        %944 = vst [vmem:[%s565 + $0x28] sm:$0xff] %v930
        %945 = vst [vmem:[%s565 + $0x30] sm:$0xff] %v931
        %v946 = vld [vmem:[%s9] sm:$0xf]
        %vm947 = vcmask 457728
        %v949 = vsel %vm947, %v946, 0
        %v952 = vsel %vm605, %v901, 0
        %v955 = vsel %vm605, %v902, 0
        %957 = vmatprep.subr.bf16.mxu0 0
        %958 = vmatpush1.bf16.msra.mxu0 0
        %959 = vmatprep.subr.bf16.mxu0 0
        %960 = vmatpush1.bf16.msra.mxu0 0
        %961 = vmatprep.subr.bf16.mxu0 0
        %962 = vmatpush1.bf16.msra.mxu0 0
        %963 = vmatprep.subr.bf16.mxu0 0
        %964 = vmatpush1.bf16.msra.mxu0 0
        %965 = vmatprep.subr.bf16.mxu0 %v955
        %966 = vmatpush1.bf16.msra.mxu0 %v952
        %967 = vmatprep.subr.bf16.mxu0 %v900
        %968 = vmatpush1.bf16.msra.mxu0 %v899
        %969 = vmatprep.subr.bf16.mxu0 %v898
        %970 = vmatpush1.bf16.msra.mxu0 %v897
        %971 = vmatprep.subr.bf16.mxu0 %v896
        %972 = vmatpush1.bf16.msra.mxu0 %v895
        %973 = vmatprep.subr.bf16.mxu0 0
        %974 = vmatpush2.bf16.msra.mxu0 0
        %975 = vmatprep.subr.bf16.mxu0 0
        %976 = vmatpush2.bf16.msra.mxu0 0
        %977 = vmatprep.subr.bf16.mxu0 0
        %978 = vmatpush2.bf16.msra.mxu0 0
        %979 = vmatprep.subr.bf16.mxu0 0
        %980 = vmatpush2.bf16.msra.mxu0 0
        %981 = vmatprep.subr.bf16.mxu0 0
        %982 = vmatpush2.bf16.msra.mxu0 0
        %983 = vmatprep.subr.bf16.mxu0 0
        %984 = vmatpush2.bf16.msra.mxu0 0
        %985 = vmatprep.subr.bf16.mxu0 0
        %986 = vmatpush2.bf16.msra.mxu0 0
        %987 = vmatprep.subr.bf16.mxu0 0
        %988 = vmatpush2.bf16.msra.mxu0 0
        %989 = vmatprep.mubr.bf16.mxu0 0
        %990 = vmatmul.mubr.bf16.gmra.mxu0 %v949
        %v991 = vpop.f32.mrf.mxu0
        %v992 = vadd.f32 0.0, %v991
        %v993 = vpop.f32.mrf.mxu0
        %v994 = vadd.f32 0.0, %v993
        %v995 = vpop.f32.mrf.mxu0
        %v996 = vpop.f32.mrf.mxu0
        %997 = vdwg.mxu0
        %s998 = sld [smem:[#allocation2]]
        %v999 = vstv %s998
        %v1000 = vadd.f32 %v992, %v999
        %v1001 = vadd.f32 %v994, %v999
        %v1002 = vxor.u32 %v1000, 2147483648
        %v1003 = vxor.u32 %v1001, 2147483648
        %v1004 = vmul.f32 %v1002, 1.442695
        %v1005 = vpow.pop %v1004
        %v1006 = vmul.f32 %v1003, 1.442695
        %v1007 = vpow.pop %v1006
        %v1008 = vadd.f32 %v1005, 1.0
        %v1009 = vadd.f32 %v1007, 1.0
        %v1010 = vrcp.pop %v1008
        %v1011 = vmul.f32 1.0, %v1010
        %v1012 = vrcp.pop %v1009
        %v1013 = vmul.f32 1.0, %v1012
        %v1016 = vcombine.low %v1011, %v1013
        %v1018 = vunpack.c.l.s4 1966171168
        %v1019 = vunpack.c.0.s8 %v1018
        %v1020 = vlaneseq
        %v1021 = vshrl.u32 %v1020, 7
        %v1022 = vsub.s32 %v1019, %v1021
        %v1023 = vrot.slane %v1016, %v1022
        %v1025 = vunpack.c.l.s4 1966171168
        %v1026 = vunpack.c.0.s8 %v1025
        %v1027 = vlaneseq
        %v1028 = vshrl.u32 %v1027, 7
        %v1029 = vsub.s32 %v1026, %v1028
        %v1030 = vrot.slane %v1023, %v1029
        %v1032 = vlaneseq
        %vm1033 = vcmp.ge.s32.totalorder %v1032, 0
        %vm1034 = vcmp.lt.s32.totalorder %v1032, 256
        %vm1035 = vmand %vm1033, %vm1034
        %1036 = vst.msk [vmem:[%s572] sm:$0x3] %vm1035, %v1030
        %s1037 = sand.u32 %s312, 1
        %s1038 = scalar_lea.sflag [#allocation5], %s1037
        %s1039 = sand.u32 %s312, 1
        %s1040 = smul.addr %s1039, 56
        %s1041 = scalar_lea.vmem [#allocation12], %s1040
        %s1042 = sand.u32 %s340, 1
        %s1043 = scalar_lea.sflag [#allocation14], %s1042
        %s1044 = sand.u32 %s340, 1
        %s1045 = smul.addr %s1044, 2
        %s1046 = scalar_lea.vmem [#allocation13], %s1045
        // Predicated region
        $region85: #{tpu_custom_call.1} parent=63 // pred_check
          %p1047 = pneg %p322
        $region86: #{tpu_custom_call.1} parent=63 // pred_check_branch
          %1049 = sbr.rel (%p1047) target = $region88
        $region87: #{tpu_custom_call.1} parent=63 // pred_region
          %s1050 = smul.u32 2, %s43
          %s1052 = ssub.s32 896, 896
          %1053 = vsyncadd %s1038, %s1052
          %s1054 = smul.addr %s42, 14
          %s1055 = sadd.s32 %s1050, %s1054
          %s1056 = smul.addr %s1055, 64
          %s1057 = scalar_lea.hbm %s11, %s1056
          %s1058 = sshll.u32 %s1041, 4
          %s1059 = int_to_ptr.vmem [resolvable:$true] %s1058
          %1064 = dma.vmem_to_hbm [thread:$0]  %s1059, 896, %s1057, %s1038, 128, 128, 8
        $region88: #{tpu_custom_call.1} parent=63 // pred_fallthru
          _
        // Predicated region
        $region89: #{tpu_custom_call.1} parent=63 // pred_check
          %p1065 = pneg %p350
        $region90: #{tpu_custom_call.1} parent=63 // pred_check_branch
          %1067 = sbr.rel (%p1065) target = $region92
        $region91: #{tpu_custom_call.1} parent=63 // pred_region
          %s1068 = smul.u32 2, %s43
          %s1070 = ssub.s32 32, 32
          %1071 = vsyncadd %s1043, %s1070
          %s1072 = smul.addr %s42, 2
          %s1073 = sadd.s32 %s1068, %s1072
          %s1074 = smul.addr %s1073, 16
          %s1075 = scalar_lea.hbm %s12, %s1074
          %s1077 = sshll.u32 %s1046, 4
          %s1078 = int_to_ptr.vmem [resolvable:$true] %s1077
          %1080 = dma.vmem_to_hbm [thread:$0]  %s1078, 32, %s1075, %s1043
        $region92: #{tpu_custom_call.1} parent=63 // pred_fallthru
          _
      $region64: #{tpu_custom_call.1} parent=5 // pred_fallthru
        _
      %p1081 = scmp.le.s32.totalorder 2, %s33
      // Predicated region
      $region93: #{tpu_custom_call.1} parent=5 // pred_check
        %p1082 = pneg %p1081
      $region94: #{tpu_custom_call.1} parent=5 // pred_check_branch
        %1084 = sbr.rel (%p1082) target = $region96
      $region95: #{tpu_custom_call.1} parent=5 // pred_region
        %s1085 = ssub.s32 %s33, 2
        // Predicated region
        $region97: #{tpu_custom_call.1} parent=95 // pred_check
          %p1086 = pneg %p328
        $region98: #{tpu_custom_call.1} parent=95 // pred_check_branch
          %1088 = sbr.rel (%p1086) target = $region100
        $region99: #{tpu_custom_call.1} parent=95 // pred_region
          %s1089 = sand.u32 %s313, 1
          %s1090 = scalar_lea.sflag [#allocation5], %s1089
          %s1091 = sand.u32 %s313, 1
          %s1092 = smul.addr %s1091, 56
          %s1093 = scalar_lea.vmem [#allocation12], %s1092
          %1094 = dma.done %s1090, 896
        $region100: #{tpu_custom_call.1} parent=95 // pred_fallthru
          _
        // Predicated region
        $region101: #{tpu_custom_call.1} parent=95 // pred_check
          %p1095 = pneg %p356
        $region102: #{tpu_custom_call.1} parent=95 // pred_check_branch
          %1097 = sbr.rel (%p1095) target = $region104
        $region103: #{tpu_custom_call.1} parent=95 // pred_region
          %s1098 = sand.u32 %s341, 1
          %s1099 = scalar_lea.sflag [#allocation14], %s1098
          %s1100 = sand.u32 %s341, 1
          %s1101 = smul.addr %s1100, 2
          %s1102 = scalar_lea.vmem [#allocation13], %s1101
          %1103 = dma.done %s1099, 32
        $region104: #{tpu_custom_call.1} parent=95 // pred_fallthru
          _
      $region96: #{tpu_custom_call.1} parent=5 // pred_fallthru
        _
    $region6: #{tpu_custom_call.1} parent=1 // loop_footer
      %s37 = sadd.s32 1, %s33
    $region7: #{tpu_custom_call.1} parent=1 // loop_footer_branch
      %32 = sbr.rel target = $region3
    $region8: #{tpu_custom_call.1} parent=1 // loop_exit
      _
    %1104 = vsyncpa [#allocation4], 1
    %s1105 = scalar_lea.sflag [#allocation4], 1
    %1106 = vsyncpa %s1105, 1
    %1107 = vsyncpa [#allocation7], 1
    %s1108 = scalar_lea.sflag [#allocation7], 1
    %1109 = vsyncpa %s1108, 1
    %1110 = vsyncpa [#allocation10], 1
    %1111 = vsyncpa [#allocation5], 1
    %s1112 = scalar_lea.sflag [#allocation5], 1
    %1113 = vsyncpa %s1112, 1
    %1114 = vsyncpa [#allocation14], 1
    %s1115 = scalar_lea.sflag [#allocation14], 1
    %1116 = vsyncpa %s1115, 1

</llo_original>
